<compile_context>
chip_gen: v5e
topology: v5e:2x2
jax: 0.10.0
libtpu: 0.0.40
codegen_flags: <defaults>
</compile_context>

<pallas_src>
import functools

import jax
import jax.numpy as jnp
from jax.experimental import pallas as pl
from jax.experimental.pallas import tpu as pltpu

_MIB = 1024 * 1024


# ---------------------------------------------------------------------------
# Kernel 1: feature transform  XW = (x @ W) * dinv  (computed ONCE per layer)
# ---------------------------------------------------------------------------
def feature_transform_kernel(x_ref, w_ref, dinv_ref, out_ref):
    xw = jnp.dot(x_ref[...], w_ref[...], preferred_element_type=jnp.float32)
    out_ref[...] = (xw * dinv_ref[...]).astype(out_ref.dtype)


def feature_transform(x, w, dinv, *, tile_m):
    pad_n, f_pad = x.shape
    o_pad = w.shape[1]
    grid = (pad_n // tile_m,)
    bytes_accessed = int(x.size * 2 + w.size * 2 + dinv.size * 4
                         + pad_n * o_pad * 2)
    return pl.pallas_call(
        feature_transform_kernel,
        out_shape=jax.ShapeDtypeStruct((pad_n, o_pad), jnp.bfloat16),
        grid_spec=pltpu.PrefetchScalarGridSpec(
            num_scalar_prefetch=0,
            grid=grid,
            in_specs=[
                pl.BlockSpec((tile_m, f_pad), lambda i: (i, 0)),   # x rows
                pl.BlockSpec((f_pad, o_pad), lambda i: (0, 0)),    # W (resident)
                pl.BlockSpec((tile_m, 1), lambda i: (i, 0)),       # dinv rows
            ],
            out_specs=pl.BlockSpec((tile_m, o_pad), lambda i: (i, 0)),
        ),
        compiler_params=pltpu.CompilerParams(
            dimension_semantics=("parallel",),
            vmem_limit_bytes=32 * _MIB,
        ),
        cost_estimate=pl.CostEstimate(
            flops=2 * pad_n * f_pad * o_pad,
            transcendentals=0,
            bytes_accessed=bytes_accessed,
        ),
    )(x, w, dinv)


# ---------------------------------------------------------------------------
# Kernel 2: aggregation  out[i] = dinv[i] * sum_k Acnt[i,k] @ XW[k]  (+ b, ReLU)
# Grid = (row tiles, reduction tiles); acc_ref is an f32 VMEM accumulator.
# ---------------------------------------------------------------------------
def gcn_aggregate_kernel(a_ref, xw_ref, dinv_ref, b_ref, out_ref, acc_ref, *,
                         apply_relu):
    k = pl.program_id(1)

    @pl.when(k == 0)
    def _():
        acc_ref[...] = jnp.zeros_like(acc_ref)

    a_bf16 = a_ref[...].astype(jnp.bfloat16)          # int8 counts -> bf16 (VPU)
    acc_ref[...] += jnp.dot(a_bf16, xw_ref[...],
                            preferred_element_type=jnp.float32)

    @pl.when(k == pl.num_programs(1) - 1)
    def _():
        y = acc_ref[...] * dinv_ref[...] + b_ref[...]   # row rescale + bias (f32)
        if apply_relu:
            y = jnp.maximum(y, 0.0)
        out_ref[...] = y.astype(out_ref.dtype)


def _agg_vmem_limit(tile_m, tile_k, o_pad, out_itemsize):
    # Double-buffered input/output tiles + resident accumulator, with margin.
    a_bufs = 2 * tile_m * tile_k * 1                 # int8 A tile
    xw_bufs = 2 * tile_k * o_pad * 2                 # bf16 XW tile
    dinv_bufs = 2 * tile_m * 128 * 4                 # (tile_m, 1) lane-padded
    b_bufs = 2 * 8 * o_pad * 4                       # (1, o_pad) sublane-padded
    out_bufs = 2 * tile_m * o_pad * out_itemsize
    acc = tile_m * o_pad * 4
    footprint = a_bufs + xw_bufs + dinv_bufs + b_bufs + out_bufs + acc
    return int(min(48 * _MIB, max(32 * _MIB, 2 * footprint)))


def gcn_aggregate(a_cnt, xw, dinv, b, *, apply_relu, out_dtype, tile_m, tile_k):
    pad_n = a_cnt.shape[0]
    o_pad = xw.shape[1]
    grid = (pad_n // tile_m, pad_n // tile_k)
    out_itemsize = jnp.dtype(out_dtype).itemsize

    flops = 2 * pad_n * pad_n * o_pad
    bytes_accessed = int(
        a_cnt.size * 1
        + grid[0] * xw.size * 2          # XW is re-streamed once per row tile
        + pad_n * o_pad * out_itemsize
        + dinv.size * 4
        + b.size * 4
    )

    return pl.pallas_call(
        functools.partial(gcn_aggregate_kernel, apply_relu=apply_relu),
        out_shape=jax.ShapeDtypeStruct((pad_n, o_pad), out_dtype),
        grid_spec=pltpu.PrefetchScalarGridSpec(
            num_scalar_prefetch=0,
            grid=grid,
            in_specs=[
                pl.BlockSpec((tile_m, tile_k), lambda i, k: (i, k)),   # Acnt int8
                pl.BlockSpec((tile_k, o_pad), lambda i, k: (k, 0)),    # XW rows
                pl.BlockSpec((tile_m, 1), lambda i, k: (i, 0)),        # dinv rows
                pl.BlockSpec((1, o_pad), lambda i, k: (0, 0)),         # bias
            ],
            out_specs=pl.BlockSpec((tile_m, o_pad), lambda i, k: (i, 0)),
            scratch_shapes=[pltpu.VMEM((tile_m, o_pad), jnp.float32)],
        ),
        compiler_params=pltpu.CompilerParams(
            dimension_semantics=("parallel", "arbitrary"),
            vmem_limit_bytes=_agg_vmem_limit(tile_m, tile_k, o_pad, out_itemsize),
        ),
        cost_estimate=pl.CostEstimate(
            flops=flops, transcendentals=0, bytes_accessed=bytes_accessed
        ),
    )(a_cnt, xw, dinv, b)


# ---------------------------------------------------------------------------
# Plain-JAX glue (dense graph construction; data-dependent scatter stays in XLA)
# ---------------------------------------------------------------------------
def build_graph(edge_index, num_nodes):
    """Unnormalized counts Acnt = A + remaining self loops, and dinv = deg^-1/2.

    A[i, j] = #edges j -> i (edge_index = [src; dst]); self loops are added only
    to nodes without one (PyG add_remaining_self_loops semantics).
    """
    src, dst = edge_index[0], edge_index[1]
    a = jnp.zeros((num_nodes, num_nodes), jnp.float32)
    a = a.at[dst, src].add(1.0)                       # duplicate edges sum, as in PyG
    diag = jnp.diagonal(a)
    a = a + jnp.diag(jnp.where(diag > 0, 0.0, 1.0))   # add_remaining_self_loops
    deg = a.sum(axis=1)
    dinv = jnp.where(deg > 0, jax.lax.rsqrt(deg), 0.0)
    return a, dinv


def _round_up(v, m):
    return ((v + m - 1) // m) * m


def _pad2d(a, rows, cols):
    return jnp.pad(a, ((0, rows - a.shape[0]), (0, cols - a.shape[1])))


def _pow2_tile(n, cap):
    """Largest power-of-two multiple of 128 that is <= min(n, cap)."""
    t = 128
    while t * 2 <= min(n, cap):
        t *= 2
    return t


def gcn_encoder(x, edge_index, w1, b1, w2, b2):
    n, in_ch = x.shape
    hid = w1.shape[1]
    z_dim = w2.shape[1]

    # Lane-pad feature dims to 128 multiples; node dim to the tile grid.
    in_p, hid_p, z_p = (_round_up(d, 128) for d in (in_ch, hid, z_dim))
    pad_n = _round_up(n, 128)
    tile_m = _pow2_tile(pad_n, 512)       # row tile
    tile_k = _pow2_tile(pad_n, 2048)      # reduction tile (dominant A stream)
    pad_n = _round_up(pad_n, max(tile_m, tile_k))
    if pad_n // tile_m < 2 and pad_n >= 256:
        tile_m = pad_n // 2               # >=2 row tiles -> v7x dual-TC sharding

    a_cnt, dinv = build_graph(edge_index, n)
    # TODO(synk): int8 counts assume <=127 parallel edges per node pair.
    a_p = _pad2d(a_cnt, pad_n, pad_n).astype(jnp.int8)
    dinv_p = _pad2d(dinv.reshape(-1, 1), pad_n, 1).astype(jnp.float32)
    x_p = _pad2d(x, pad_n, in_p).astype(jnp.bfloat16)
    w1_p = _pad2d(w1, in_p, hid_p).astype(jnp.bfloat16)
    b1_p = _pad2d(b1.reshape(1, -1), 1, hid_p).astype(jnp.float32)
    w2_p = _pad2d(w2, hid_p, z_p).astype(jnp.bfloat16)
    b2_p = _pad2d(b2.reshape(1, -1), 1, z_p).astype(jnp.float32)

    # Layer 1: XW1 = (x @ W1) * dinv ;  h1 = relu(dinv * (Acnt @ XW1) + b1)
    xw1 = feature_transform(x_p, w1_p, dinv_p, tile_m=tile_m)
    h1 = gcn_aggregate(a_p, xw1, dinv_p, b1_p, apply_relu=True,
                       out_dtype=jnp.bfloat16, tile_m=tile_m, tile_k=tile_k)
    # Layer 2: XW2 = (h1 @ W2) * dinv ;  out = dinv * (Acnt @ XW2) + b2
    xw2 = feature_transform(h1, w2_p, dinv_p, tile_m=tile_m)
    out = gcn_aggregate(a_p, xw2, dinv_p, b2_p, apply_relu=False,
                        out_dtype=jnp.float32, tile_m=tile_m, tile_k=tile_k)
    return out[:n, :z_dim]


def glorot(key, fan_in, fan_out):
    limit = jnp.sqrt(6.0 / (fan_in + fan_out))
    return jax.random.uniform(key, (fan_in, fan_out), jnp.float32, -limit, limit)


if __name__ == "__main__":
    # Small config consistent with the module: options = {'in_channels': 8, 'z_dim': 16}
    N = 16           # number of nodes
    IN_CH = 8        # in_channels
    Z_DIM = 16       # z_dim  -> hidden = 2*z_dim = 32
    HID = 2 * Z_DIM
    E = 48           # number of edges

    key = jax.random.PRNGKey(0)
    k_x, k_src, k_off, k_w1, k_w2 = jax.random.split(key, 5)

    # Node features
    x = jax.random.normal(k_x, (N, IN_CH), jnp.float32)

    # Deterministic edge_index (2, E), no self loops
    src = jax.random.randint(k_src, (E,), 0, N)
    off = jax.random.randint(k_off, (E,), 1, N)
    dst = (src + off) % N
    edge_index = jnp.stack([src, dst], axis=0).astype(jnp.int32)

    # Parameters (glorot weights, zero biases — matches GCNConv init scheme)
    w1 = glorot(k_w1, IN_CH, HID)          # conv1.lin.weight^T
    b1 = jnp.zeros((1, HID), jnp.float32)  # conv1.bias
    w2 = glorot(k_w2, HID, Z_DIM)          # conv2.lin.weight^T
    b2 = jnp.zeros((1, Z_DIM), jnp.float32)

    out = jax.jit(gcn_encoder)(x, edge_index, w1, b1, w2, b2)
    out = jax.block_until_ready(out)

    # Pure-JAX f32 reference (kernels use bf16 MXU operands -> loose tolerance)
    a_cnt, dinv = build_graph(edge_index, N)
    a_hat = dinv[:, None] * a_cnt * dinv[None, :]
    ref_h = jnp.maximum(a_hat @ (x @ w1) + b1, 0.0)
    ref = a_hat @ (ref_h @ w2) + b2
    assert out.shape == (N, Z_DIM)
    assert jnp.allclose(out, ref, atol=5e-2, rtol=5e-2), (
        float(jnp.max(jnp.abs(out - ref))))

    print("KERNEL_OK")
</pallas_src>

<mosaic_0001>
module attributes {stable_mosaic.version = 11 : i64} {
  func.func @feature_transform_kernel(%arg0: i32, %arg1: memref<128x128xbf16, #tpu.memory_space<vmem>>, %arg2: memref<128x128xbf16, #tpu.memory_space<vmem>>, %arg3: memref<128x1xf32, #tpu.memory_space<vmem>>, %arg4: memref<128x128xbf16, #tpu.memory_space<vmem>>) attributes {dimension_semantics = [#tpu.dimension_semantics<parallel>], iteration_bounds = array<i64: 1>, scalar_prefetch = 0 : i64, scratch_operands = 0 : i64, tpu.core_type = #tpu.core_type<tc>, window_params = [{transform_indices = @transform_0, window_bounds = array<i64: 128, 128>}, {pipeline_mode = #tpu.pipeline_mode<synchronous>, transform_indices = @transform_1, window_bounds = array<i64: 128, 128>}, {transform_indices = @transform_2, window_bounds = array<i64: 128, 1>}, {transform_indices = @transform_3, window_bounds = array<i64: 128, 128>}]} {
    %c0 = arith.constant 0 : index
    %c0_0 = arith.constant 0 : index
    %0 = vector.load %arg1[%c0, %c0_0] : memref<128x128xbf16, #tpu.memory_space<vmem>>, vector<128x128xbf16>
    %c0_1 = arith.constant 0 : index
    %c0_2 = arith.constant 0 : index
    %1 = vector.load %arg2[%c0_1, %c0_2] : memref<128x128xbf16, #tpu.memory_space<vmem>>, vector<128x128xbf16>
    %cst = arith.constant dense<0.000000e+00> : vector<128x128xf32>
    %2 = tpu.matmul %0, %1, %cst {dimension_numbers = #tpu.dot_dimension_numbers<[1], [0], [0], [1], [0, 0, 1, 1], [], []>} : vector<128x128xbf16>, vector<128x128xbf16>, vector<128x128xf32> -> vector<128x128xf32>
    %c0_3 = arith.constant 0 : index
    %c0_4 = arith.constant 0 : index
    %3 = vector.load %arg3[%c0_3, %c0_4] : memref<128x1xf32, #tpu.memory_space<vmem>>, vector<128x1xf32>
    %4 = vector.broadcast %3 : vector<128x1xf32> to vector<128x128xf32>
    %5 = arith.mulf %2, %4 : vector<128x128xf32>
    %6 = arith.truncf %5 : vector<128x128xf32> to vector<128x128xbf16>
    %c0_5 = arith.constant 0 : index
    %c0_6 = arith.constant 0 : index
    %7 = vector.load %arg4[%c0_5, %c0_6] : memref<128x128xbf16, #tpu.memory_space<vmem>>, vector<128x128xbf16>
    tpu.vector_store %arg4[%c0_5, %c0_6], %6 {strides = array<i32>} : memref<128x128xbf16, #tpu.memory_space<vmem>>, vector<128x128xbf16>,
    return
  }
  func.func @transform_0(%arg0: i32) -> (i32, i32) {
    %c0_i32 = arith.constant 0 : i32
    %c0_i32_0 = arith.constant 0 : i32
    return %arg0, %c0_i32 : i32, i32
  }
  func.func @transform_1(%arg0: i32) -> (i32, i32) {
    %c0_i32 = arith.constant 0 : i32
    %c0_i32_0 = arith.constant 0 : i32
    %c0_i32_1 = arith.constant 0 : i32
    return %c0_i32, %c0_i32_0 : i32, i32
  }
  func.func @transform_2(%arg0: i32) -> (i32, i32) {
    %c0_i32 = arith.constant 0 : i32
    %c0_i32_0 = arith.constant 0 : i32
    return %arg0, %c0_i32 : i32, i32
  }
  func.func @transform_3(%arg0: i32) -> (i32, i32) {
    %c0_i32 = arith.constant 0 : i32
    %c0_i32_0 = arith.constant 0 : i32
    return %arg0, %c0_i32 : i32, i32
  }
}

module attributes {stable_mosaic.version = 11 : i64} {
  func.func @gcn_aggregate_kernel(%arg0: i32, %arg1: i32, %arg2: memref<128x128xi8, #tpu.memory_space<vmem>>, %arg3: memref<128x128xbf16, #tpu.memory_space<vmem>>, %arg4: memref<128x1xf32, #tpu.memory_space<vmem>>, %arg5: memref<1x128xf32, #tpu.memory_space<vmem>>, %arg6: memref<128x128xbf16, #tpu.memory_space<vmem>>, %arg7: memref<128x128xf32, #tpu.memory_space<vmem>>) attributes {dimension_semantics = [#tpu.dimension_semantics<parallel>, #tpu.dimension_semantics<arbitrary>], iteration_bounds = array<i64: 1, 1>, scalar_prefetch = 0 : i64, scratch_operands = 1 : i64, tpu.core_type = #tpu.core_type<tc>, window_params = [{transform_indices = @transform_0, window_bounds = array<i64: 128, 128>}, {transform_indices = @transform_1, window_bounds = array<i64: 128, 128>}, {transform_indices = @transform_2, window_bounds = array<i64: 128, 1>}, {pipeline_mode = #tpu.pipeline_mode<synchronous>, transform_indices = @transform_3, window_bounds = array<i64: 1, 128>}, {transform_indices = @transform_4, window_bounds = array<i64: 128, 128>}]} {
    %c0_i32 = arith.constant 0 : i32
    %0 = arith.cmpi eq, %arg1, %c0_i32 : i32
    %1 = arith.extui %0 : i1 to i32
    %c0_i32_0 = arith.constant 0 : i32
    %2 = arith.cmpi ne, %1, %c0_i32_0 : i32
    scf.if %2 {
      %cst_10 = arith.constant 0.000000e+00 : f32
      %13 = vector.broadcast %cst_10 : f32 to vector<128x128xf32>
      %c0_11 = arith.constant 0 : index
      %c0_12 = arith.constant 0 : index
      %14 = vector.load %arg7[%c0_11, %c0_12] : memref<128x128xf32, #tpu.memory_space<vmem>>, vector<128x128xf32>
      tpu.vector_store %arg7[%c0_11, %c0_12], %13 {strides = array<i32>} : memref<128x128xf32, #tpu.memory_space<vmem>>, vector<128x128xf32>,
    } else {
    }
    %c0 = arith.constant 0 : index
    %c0_1 = arith.constant 0 : index
    %3 = vector.load %arg2[%c0, %c0_1] : memref<128x128xi8, #tpu.memory_space<vmem>>, vector<128x128xi8>
    %4 = arith.sitofp %3 : vector<128x128xi8> to vector<128x128xbf16>
    %c0_2 = arith.constant 0 : index
    %c0_3 = arith.constant 0 : index
    %5 = vector.load %arg7[%c0_2, %c0_3] : memref<128x128xf32, #tpu.memory_space<vmem>>, vector<128x128xf32>
    %c0_4 = arith.constant 0 : index
    %c0_5 = arith.constant 0 : index
    %6 = vector.load %arg3[%c0_4, %c0_5] : memref<128x128xbf16, #tpu.memory_space<vmem>>, vector<128x128xbf16>
    %cst = arith.constant dense<0.000000e+00> : vector<128x128xf32>
    %7 = tpu.matmul %4, %6, %cst {dimension_numbers = #tpu.dot_dimension_numbers<[1], [0], [0], [1], [0, 0, 1, 1], [], []>} : vector<128x128xbf16>, vector<128x128xbf16>, vector<128x128xf32> -> vector<128x128xf32>
    %8 = arith.addf %5, %7 : vector<128x128xf32>
    %c0_6 = arith.constant 0 : index
    %c0_7 = arith.constant 0 : index
    %9 = vector.load %arg7[%c0_6, %c0_7] : memref<128x128xf32, #tpu.memory_space<vmem>>, vector<128x128xf32>
    tpu.vector_store %arg7[%c0_6, %c0_7], %8 {strides = array<i32>} : memref<128x128xf32, #tpu.memory_space<vmem>>, vector<128x128xf32>,
    %c0_i32_8 = arith.constant 0 : i32
    %10 = arith.cmpi eq, %arg1, %c0_i32_8 : i32
    %11 = arith.extui %10 : i1 to i32
    %c0_i32_9 = arith.constant 0 : i32
    %12 = arith.cmpi ne, %11, %c0_i32_9 : i32
    scf.if %12 {
      %c0_10 = arith.constant 0 : index
      %c0_11 = arith.constant 0 : index
      %13 = vector.load %arg7[%c0_10, %c0_11] : memref<128x128xf32, #tpu.memory_space<vmem>>, vector<128x128xf32>
      %c0_12 = arith.constant 0 : index
      %c0_13 = arith.constant 0 : index
      %14 = vector.load %arg4[%c0_12, %c0_13] : memref<128x1xf32, #tpu.memory_space<vmem>>, vector<128x1xf32>
      %15 = vector.broadcast %14 : vector<128x1xf32> to vector<128x128xf32>
      %16 = arith.mulf %13, %15 : vector<128x128xf32>
      %c0_14 = arith.constant 0 : index
      %c0_15 = arith.constant 0 : index
      %17 = vector.load %arg5[%c0_14, %c0_15] : memref<1x128xf32, #tpu.memory_space<vmem>>, vector<1x128xf32>
      %18 = vector.broadcast %17 : vector<1x128xf32> to vector<128x128xf32>
      %19 = arith.addf %16, %18 : vector<128x128xf32>
      %cst_16 = arith.constant 0.000000e+00 : f32
      %20 = vector.broadcast %cst_16 : f32 to vector<128x128xf32>
      %21 = arith.maximumf %19, %20 : vector<128x128xf32>
      %22 = arith.truncf %21 : vector<128x128xf32> to vector<128x128xbf16>
      %c0_17 = arith.constant 0 : index
      %c0_18 = arith.constant 0 : index
      %23 = vector.load %arg6[%c0_17, %c0_18] : memref<128x128xbf16, #tpu.memory_space<vmem>>, vector<128x128xbf16>
      tpu.vector_store %arg6[%c0_17, %c0_18], %22 {strides = array<i32>} : memref<128x128xbf16, #tpu.memory_space<vmem>>, vector<128x128xbf16>,
    } else {
    }
    return
  }
  func.func @transform_0(%arg0: i32, %arg1: i32) -> (i32, i32) {
    %c0_i32 = arith.constant 0 : i32
    return %arg0, %arg1 : i32, i32
  }
  func.func @transform_1(%arg0: i32, %arg1: i32) -> (i32, i32) {
    %c0_i32 = arith.constant 0 : i32
    %c0_i32_0 = arith.constant 0 : i32
    return %arg1, %c0_i32 : i32, i32
  }
  func.func @transform_2(%arg0: i32, %arg1: i32) -> (i32, i32) {
    %c0_i32 = arith.constant 0 : i32
    %c0_i32_0 = arith.constant 0 : i32
    return %arg0, %c0_i32 : i32, i32
  }
  func.func @transform_3(%arg0: i32, %arg1: i32) -> (i32, i32) {
    %c0_i32 = arith.constant 0 : i32
    %c0_i32_0 = arith.constant 0 : i32
    %c0_i32_1 = arith.constant 0 : i32
    return %c0_i32, %c0_i32_0 : i32, i32
  }
  func.func @transform_4(%arg0: i32, %arg1: i32) -> (i32, i32) {
    %c0_i32 = arith.constant 0 : i32
    %c0_i32_0 = arith.constant 0 : i32
    return %arg0, %c0_i32 : i32, i32
  }
}

module attributes {stable_mosaic.version = 11 : i64} {
  func.func @gcn_aggregate_kernel(%arg0: i32, %arg1: i32, %arg2: memref<128x128xi8, #tpu.memory_space<vmem>>, %arg3: memref<128x128xbf16, #tpu.memory_space<vmem>>, %arg4: memref<128x1xf32, #tpu.memory_space<vmem>>, %arg5: memref<1x128xf32, #tpu.memory_space<vmem>>, %arg6: memref<128x128xf32, #tpu.memory_space<vmem>>, %arg7: memref<128x128xf32, #tpu.memory_space<vmem>>) attributes {dimension_semantics = [#tpu.dimension_semantics<parallel>, #tpu.dimension_semantics<arbitrary>], iteration_bounds = array<i64: 1, 1>, scalar_prefetch = 0 : i64, scratch_operands = 1 : i64, tpu.core_type = #tpu.core_type<tc>, window_params = [{transform_indices = @transform_0, window_bounds = array<i64: 128, 128>}, {transform_indices = @transform_1, window_bounds = array<i64: 128, 128>}, {transform_indices = @transform_2, window_bounds = array<i64: 128, 1>}, {pipeline_mode = #tpu.pipeline_mode<synchronous>, transform_indices = @transform_3, window_bounds = array<i64: 1, 128>}, {transform_indices = @transform_4, window_bounds = array<i64: 128, 128>}]} {
    %c0_i32 = arith.constant 0 : i32
    %0 = arith.cmpi eq, %arg1, %c0_i32 : i32
    %1 = arith.extui %0 : i1 to i32
    %c0_i32_0 = arith.constant 0 : i32
    %2 = arith.cmpi ne, %1, %c0_i32_0 : i32
    scf.if %2 {
      %cst_10 = arith.constant 0.000000e+00 : f32
      %13 = vector.broadcast %cst_10 : f32 to vector<128x128xf32>
      %c0_11 = arith.constant 0 : index
      %c0_12 = arith.constant 0 : index
      %14 = vector.load %arg7[%c0_11, %c0_12] : memref<128x128xf32, #tpu.memory_space<vmem>>, vector<128x128xf32>
      tpu.vector_store %arg7[%c0_11, %c0_12], %13 {strides = array<i32>} : memref<128x128xf32, #tpu.memory_space<vmem>>, vector<128x128xf32>,
    } else {
    }
    %c0 = arith.constant 0 : index
    %c0_1 = arith.constant 0 : index
    %3 = vector.load %arg2[%c0, %c0_1] : memref<128x128xi8, #tpu.memory_space<vmem>>, vector<128x128xi8>
    %4 = arith.sitofp %3 : vector<128x128xi8> to vector<128x128xbf16>
    %c0_2 = arith.constant 0 : index
    %c0_3 = arith.constant 0 : index
    %5 = vector.load %arg7[%c0_2, %c0_3] : memref<128x128xf32, #tpu.memory_space<vmem>>, vector<128x128xf32>
    %c0_4 = arith.constant 0 : index
    %c0_5 = arith.constant 0 : index
    %6 = vector.load %arg3[%c0_4, %c0_5] : memref<128x128xbf16, #tpu.memory_space<vmem>>, vector<128x128xbf16>
    %cst = arith.constant dense<0.000000e+00> : vector<128x128xf32>
    %7 = tpu.matmul %4, %6, %cst {dimension_numbers = #tpu.dot_dimension_numbers<[1], [0], [0], [1], [0, 0, 1, 1], [], []>} : vector<128x128xbf16>, vector<128x128xbf16>, vector<128x128xf32> -> vector<128x128xf32>
    %8 = arith.addf %5, %7 : vector<128x128xf32>
    %c0_6 = arith.constant 0 : index
    %c0_7 = arith.constant 0 : index
    %9 = vector.load %arg7[%c0_6, %c0_7] : memref<128x128xf32, #tpu.memory_space<vmem>>, vector<128x128xf32>
    tpu.vector_store %arg7[%c0_6, %c0_7], %8 {strides = array<i32>} : memref<128x128xf32, #tpu.memory_space<vmem>>, vector<128x128xf32>,
    %c0_i32_8 = arith.constant 0 : i32
    %10 = arith.cmpi eq, %arg1, %c0_i32_8 : i32
    %11 = arith.extui %10 : i1 to i32
    %c0_i32_9 = arith.constant 0 : i32
    %12 = arith.cmpi ne, %11, %c0_i32_9 : i32
    scf.if %12 {
      %c0_10 = arith.constant 0 : index
      %c0_11 = arith.constant 0 : index
      %13 = vector.load %arg7[%c0_10, %c0_11] : memref<128x128xf32, #tpu.memory_space<vmem>>, vector<128x128xf32>
      %c0_12 = arith.constant 0 : index
      %c0_13 = arith.constant 0 : index
      %14 = vector.load %arg4[%c0_12, %c0_13] : memref<128x1xf32, #tpu.memory_space<vmem>>, vector<128x1xf32>
      %15 = vector.broadcast %14 : vector<128x1xf32> to vector<128x128xf32>
      %16 = arith.mulf %13, %15 : vector<128x128xf32>
      %c0_14 = arith.constant 0 : index
      %c0_15 = arith.constant 0 : index
      %17 = vector.load %arg5[%c0_14, %c0_15] : memref<1x128xf32, #tpu.memory_space<vmem>>, vector<1x128xf32>
      %18 = vector.broadcast %17 : vector<1x128xf32> to vector<128x128xf32>
      %19 = arith.addf %16, %18 : vector<128x128xf32>
      %c0_16 = arith.constant 0 : index
      %c0_17 = arith.constant 0 : index
      %20 = vector.load %arg6[%c0_16, %c0_17] : memref<128x128xf32, #tpu.memory_space<vmem>>, vector<128x128xf32>
      tpu.vector_store %arg6[%c0_16, %c0_17], %19 {strides = array<i32>} : memref<128x128xf32, #tpu.memory_space<vmem>>, vector<128x128xf32>,
    } else {
    }
    return
  }
  func.func @transform_0(%arg0: i32, %arg1: i32) -> (i32, i32) {
    %c0_i32 = arith.constant 0 : i32
    return %arg0, %arg1 : i32, i32
  }
  func.func @transform_1(%arg0: i32, %arg1: i32) -> (i32, i32) {
    %c0_i32 = arith.constant 0 : i32
    %c0_i32_0 = arith.constant 0 : i32
    return %arg1, %c0_i32 : i32, i32
  }
  func.func @transform_2(%arg0: i32, %arg1: i32) -> (i32, i32) {
    %c0_i32 = arith.constant 0 : i32
    %c0_i32_0 = arith.constant 0 : i32
    return %arg0, %c0_i32 : i32, i32
  }
  func.func @transform_3(%arg0: i32, %arg1: i32) -> (i32, i32) {
    %c0_i32 = arith.constant 0 : i32
    %c0_i32_0 = arith.constant 0 : i32
    %c0_i32_1 = arith.constant 0 : i32
    return %c0_i32, %c0_i32_0 : i32, i32
  }
  func.func @transform_4(%arg0: i32, %arg1: i32) -> (i32, i32) {
    %c0_i32 = arith.constant 0 : i32
    %c0_i32_0 = arith.constant 0 : i32
    return %arg0, %c0_i32 : i32, i32
  }
}

</mosaic_0001>

<llo_original>
// kernel: gcn_encoder.5
$region0: #{gcn_encoder.5}
  #allocation0 [shape = 'u32[]', space=smem, size = 0x4, offset = 0x4, fixed_abs, tag = 'smem constant byte address 0x4 - core index']
  #allocation1 [shape = 'u32[72,128]{1,0:T(1,128)}', space=vmem, size = 0x9000, scoped, tag = 'internal scratch']
  #allocation2 [shape = 'f32[128,128]{1,0:T(8,128)}', space=vmem, size = 0x10000, scoped, tag = 'scratch operand']
  %s0 = inlined_call_operand.vmem [shape: s8[128,128], index: 0, kind: input, shape index: {}]
  %s1 = inlined_call_operand.vmem [shape: bf16[128,128], index: 1, kind: input, shape index: {}]
  %s2 = inlined_call_operand.vmem [shape: f32[128,1], index: 2, kind: input, shape index: {}]
  %s3 = inlined_call_operand.vmem [shape: f32[1,128], index: 3, kind: input, shape index: {}]
  %s4 = inlined_call_operand.vmem [shape: bf16[128,128], index: 4, kind: output, shape index: {}]
  %s5 = sld [smem:[#allocation0]]
  $region34: #{gcn_encoder.5} parent=0
    _
  %s7 = ssub.s32 1, %s5
  %s8 = scalar_select 0, %s7, %s5
  // Predicated region
  $region2: #{gcn_encoder.5} parent=0 // pred_check
    _
  $region3: #{gcn_encoder.5} parent=0 // pred_check_branch
    %10 = sbr.rel (0) target = $region5
  $region4: #{gcn_encoder.5} parent=0 // pred_region
    _
  $region5: #{gcn_encoder.5} parent=0 // pred_fallthru
    _
  // Predicated region
  $region6: #{gcn_encoder.5} parent=0 // pred_check
    _
  $region7: #{gcn_encoder.5} parent=0 // pred_check_branch
    %12 = sbr.rel (0) target = $region9
  $region8: #{gcn_encoder.5} parent=0 // pred_region
    _
  $region9: #{gcn_encoder.5} parent=0 // pred_fallthru
    _
  // Predicated region
  $region10: #{gcn_encoder.5} parent=0 // pred_check
    _
  $region11: #{gcn_encoder.5} parent=0 // pred_check_branch
    %14 = sbr.rel (0) target = $region13
  $region12: #{gcn_encoder.5} parent=0 // pred_region
    _
  $region13: #{gcn_encoder.5} parent=0 // pred_fallthru
    _
  // Predicated region
  $region14: #{gcn_encoder.5} parent=0 // pred_check
    _
  $region15: #{gcn_encoder.5} parent=0 // pred_check_branch
    %16 = sbr.rel (0) target = $region17
  $region16: #{gcn_encoder.5} parent=0 // pred_region
    _
  $region17: #{gcn_encoder.5} parent=0 // pred_fallthru
    _
  %p17 = scmp.eq.s32.totalorder 0, 0
  // Predicated region
  $region18: #{gcn_encoder.5} parent=0 // pred_check
    %p18 = pneg %p17
  $region19: #{gcn_encoder.5} parent=0 // pred_check_branch
    %20 = sbr.rel (%p18) target = $region21
  $region20: #{gcn_encoder.5} parent=0 // pred_region
    %21 = vst [vmem:[#allocation2] sm:$0xff] 0.0
    %22 = vst [vmem:[#allocation2 + $0x8] sm:$0xff] 0.0
    %23 = vst [vmem:[#allocation2 + $0x10] sm:$0xff] 0.0
    %24 = vst [vmem:[#allocation2 + $0x18] sm:$0xff] 0.0
    %25 = vst [vmem:[#allocation2 + $0x20] sm:$0xff] 0.0
    %26 = vst [vmem:[#allocation2 + $0x28] sm:$0xff] 0.0
    %27 = vst [vmem:[#allocation2 + $0x30] sm:$0xff] 0.0
    %28 = vst [vmem:[#allocation2 + $0x38] sm:$0xff] 0.0
    %29 = vst [vmem:[#allocation2 + $0x40] sm:$0xff] 0.0
    %30 = vst [vmem:[#allocation2 + $0x48] sm:$0xff] 0.0
    %31 = vst [vmem:[#allocation2 + $0x50] sm:$0xff] 0.0
    %32 = vst [vmem:[#allocation2 + $0x58] sm:$0xff] 0.0
    %33 = vst [vmem:[#allocation2 + $0x60] sm:$0xff] 0.0
    %34 = vst [vmem:[#allocation2 + $0x68] sm:$0xff] 0.0
    %35 = vst [vmem:[#allocation2 + $0x70] sm:$0xff] 0.0
    %36 = vst [vmem:[#allocation2 + $0x78] sm:$0xff] 0.0
  $region21: #{gcn_encoder.5} parent=0 // pred_fallthru
    _
  %v37 = vld [vmem:[%s0] sm:$0xff]
  %v38 = vld [vmem:[%s0 + $0x8] sm:$0xff]
  %v39 = vld [vmem:[%s0 + $0x10] sm:$0xff]
  %v40 = vld [vmem:[%s0 + $0x18] sm:$0xff]
  %v41 = vunpack.c.0.s8 %v37
  %v42 = vunpack.c.1.s8 %v37
  %v43 = vunpack.c.2.s8 %v37
  %v44 = vunpack.c.3.s8 %v37
  %v45 = vunpack.c.0.s8 %v38
  %v46 = vunpack.c.1.s8 %v38
  %v47 = vunpack.c.2.s8 %v38
  %v48 = vunpack.c.3.s8 %v38
  %v49 = vunpack.c.0.s8 %v39
  %v50 = vunpack.c.1.s8 %v39
  %v51 = vunpack.c.2.s8 %v39
  %v52 = vunpack.c.3.s8 %v39
  %v53 = vunpack.c.0.s8 %v40
  %v54 = vunpack.c.1.s8 %v40
  %v55 = vunpack.c.2.s8 %v40
  %v56 = vunpack.c.3.s8 %v40
  %v57 = vcvt.s32.f32 %v41
  %v58 = vcvt.s32.f32 %v42
  %v59 = vcvt.s32.f32 %v43
  %v60 = vcvt.s32.f32 %v44
  %v61 = vcvt.s32.f32 %v45
  %v62 = vcvt.s32.f32 %v46
  %v63 = vcvt.s32.f32 %v47
  %v64 = vcvt.s32.f32 %v48
  %v65 = vcvt.s32.f32 %v49
  %v66 = vcvt.s32.f32 %v50
  %v67 = vcvt.s32.f32 %v51
  %v68 = vcvt.s32.f32 %v52
  %v69 = vcvt.s32.f32 %v53
  %v70 = vcvt.s32.f32 %v54
  %v71 = vcvt.s32.f32 %v55
  %v72 = vcvt.s32.f32 %v56
  %v73 = vpack.c.bf16 %v58, %v57
  %v74 = vpack.c.bf16 %v60, %v59
  %v75 = vpack.c.bf16 %v62, %v61
  %v76 = vpack.c.bf16 %v64, %v63
  %v77 = vpack.c.bf16 %v66, %v65
  %v78 = vpack.c.bf16 %v68, %v67
  %v79 = vpack.c.bf16 %v70, %v69
  %v80 = vpack.c.bf16 %v72, %v71
  %v81 = vld [vmem:[#allocation2] sm:$0xff]
  %v82 = vld [vmem:[#allocation2 + $0x8] sm:$0xff]
  %v83 = vld [vmem:[#allocation2 + $0x10] sm:$0xff]
  %v84 = vld [vmem:[#allocation2 + $0x18] sm:$0xff]
  %v85 = vld [vmem:[#allocation2 + $0x20] sm:$0xff]
  %v86 = vld [vmem:[#allocation2 + $0x28] sm:$0xff]
  %v87 = vld [vmem:[#allocation2 + $0x30] sm:$0xff]
  %v88 = vld [vmem:[#allocation2 + $0x38] sm:$0xff]
  %v89 = vld [vmem:[#allocation2 + $0x40] sm:$0xff]
  %v90 = vld [vmem:[#allocation2 + $0x48] sm:$0xff]
  %v91 = vld [vmem:[#allocation2 + $0x50] sm:$0xff]
  %v92 = vld [vmem:[#allocation2 + $0x58] sm:$0xff]
  %v93 = vld [vmem:[#allocation2 + $0x60] sm:$0xff]
  %v94 = vld [vmem:[#allocation2 + $0x68] sm:$0xff]
  %v95 = vld [vmem:[#allocation2 + $0x70] sm:$0xff]
  %v96 = vld [vmem:[#allocation2 + $0x78] sm:$0xff]
  %v97 = vld [vmem:[%s1] sm:$0xf]
  %v98 = vld [vmem:[%s1 + $0x4] sm:$0xf]
  %v99 = vld [vmem:[%s1 + $0x8] sm:$0xf]
  %v100 = vld [vmem:[%s1 + $0xc] sm:$0xf]
  %v101 = vld [vmem:[%s1 + $0x10] sm:$0xf]
  %v102 = vld [vmem:[%s1 + $0x14] sm:$0xf]
  %v103 = vld [vmem:[%s1 + $0x18] sm:$0xf]
  %v104 = vld [vmem:[%s1 + $0x1c] sm:$0xf]
  %v105 = vld [vmem:[%s1 + $0x20] sm:$0xf]
  %v106 = vld [vmem:[%s1 + $0x24] sm:$0xf]
  %v107 = vld [vmem:[%s1 + $0x28] sm:$0xf]
  %v108 = vld [vmem:[%s1 + $0x2c] sm:$0xf]
  %v109 = vld [vmem:[%s1 + $0x30] sm:$0xf]
  %v110 = vld [vmem:[%s1 + $0x34] sm:$0xf]
  %v111 = vld [vmem:[%s1 + $0x38] sm:$0xf]
  %v112 = vld [vmem:[%s1 + $0x3c] sm:$0xf]
  %v129 = vunpack.c.l.b16 %v97
  %v130 = vunpack.c.l.b16 %v98
  %v131 = vunpack.c.l.b16 %v99
  %v132 = vunpack.c.l.b16 %v100
  %v133 = vunpack.c.l.b16 %v101
  %v134 = vunpack.c.l.b16 %v102
  %v135 = vunpack.c.l.b16 %v103
  %v136 = vunpack.c.l.b16 %v104
  %v137 = vunpack.c.l.b16 %v105
  %v138 = vunpack.c.l.b16 %v106
  %v139 = vunpack.c.l.b16 %v107
  %v140 = vunpack.c.l.b16 %v108
  %v141 = vunpack.c.l.b16 %v109
  %v142 = vunpack.c.l.b16 %v110
  %v143 = vunpack.c.l.b16 %v111
  %v144 = vunpack.c.l.b16 %v112
  %v145 = vpack.c.b16 %v130, %v129
  %v146 = vpack.c.b16 %v132, %v131
  %v147 = vpack.c.b16 %v134, %v133
  %v148 = vpack.c.b16 %v136, %v135
  %v149 = vpack.c.b16 %v138, %v137
  %v150 = vpack.c.b16 %v140, %v139
  %v151 = vpack.c.b16 %v142, %v141
  %v152 = vpack.c.b16 %v144, %v143
  %161 = vmatpush.bf16.msra.mxu0 %v152
  %162 = vmatpush.bf16.msra.mxu0 %v151
  %163 = vmatpush.bf16.msra.mxu0 %v150
  %164 = vmatpush.bf16.msra.mxu0 %v149
  %165 = vmatpush.bf16.msra.mxu0 %v148
  %166 = vmatpush.bf16.msra.mxu0 %v147
  %167 = vmatpush.bf16.msra.mxu0 %v146
  %168 = vmatpush.bf16.msra.mxu0 %v145
  %169 = vmatmul.bf16.gmra.mxu0 %v73
  %v170 = vpop.f32.mrf.mxu0
  %v171 = vadd.f32 0.0, %v170
  %v172 = vpop.f32.mrf.mxu0
  %v173 = vadd.f32 0.0, %v172
  %174 = vmatmul.bf16.gmra.mxu0 %v74
  %v175 = vpop.f32.mrf.mxu0
  %v176 = vadd.f32 0.0, %v175
  %v177 = vpop.f32.mrf.mxu0
  %v178 = vadd.f32 0.0, %v177
  %179 = vmatmul.bf16.gmra.mxu0 %v75
  %v180 = vpop.f32.mrf.mxu0
  %v181 = vadd.f32 0.0, %v180
  %v182 = vpop.f32.mrf.mxu0
  %v183 = vadd.f32 0.0, %v182
  %184 = vmatmul.bf16.gmra.mxu0 %v76
  %v185 = vpop.f32.mrf.mxu0
  %v186 = vadd.f32 0.0, %v185
  %v187 = vpop.f32.mrf.mxu0
  %v188 = vadd.f32 0.0, %v187
  %189 = vmatmul.bf16.gmra.mxu0 %v77
  %v190 = vpop.f32.mrf.mxu0
  %v191 = vadd.f32 0.0, %v190
  %v192 = vpop.f32.mrf.mxu0
  %v193 = vadd.f32 0.0, %v192
  %194 = vmatmul.bf16.gmra.mxu0 %v78
  %v195 = vpop.f32.mrf.mxu0
  %v196 = vadd.f32 0.0, %v195
  %v197 = vpop.f32.mrf.mxu0
  %v198 = vadd.f32 0.0, %v197
  %199 = vmatmul.bf16.gmra.mxu0 %v79
  %v200 = vpop.f32.mrf.mxu0
  %v201 = vadd.f32 0.0, %v200
  %v202 = vpop.f32.mrf.mxu0
  %v203 = vadd.f32 0.0, %v202
  %204 = vmatmul.bf16.gmra.mxu0 %v80
  %v205 = vpop.f32.mrf.mxu0
  %v206 = vadd.f32 0.0, %v205
  %v207 = vpop.f32.mrf.mxu0
  %v208 = vadd.f32 0.0, %v207
  %209 = vdwg.mxu0
  %v210 = vadd.f32 %v81, %v171
  %v211 = vadd.f32 %v82, %v173
  %v212 = vadd.f32 %v83, %v176
  %v213 = vadd.f32 %v84, %v178
  %v214 = vadd.f32 %v85, %v181
  %v215 = vadd.f32 %v86, %v183
  %v216 = vadd.f32 %v87, %v186
  %v217 = vadd.f32 %v88, %v188
  %v218 = vadd.f32 %v89, %v191
  %v219 = vadd.f32 %v90, %v193
  %v220 = vadd.f32 %v91, %v196
  %v221 = vadd.f32 %v92, %v198
  %v222 = vadd.f32 %v93, %v201
  %v223 = vadd.f32 %v94, %v203
  %v224 = vadd.f32 %v95, %v206
  %v225 = vadd.f32 %v96, %v208
  %226 = vst [vmem:[#allocation2] sm:$0xff] %v210
  %227 = vst [vmem:[#allocation2 + $0x8] sm:$0xff] %v211
  %228 = vst [vmem:[#allocation2 + $0x10] sm:$0xff] %v212
  %229 = vst [vmem:[#allocation2 + $0x18] sm:$0xff] %v213
  %230 = vst [vmem:[#allocation2 + $0x20] sm:$0xff] %v214
  %231 = vst [vmem:[#allocation2 + $0x28] sm:$0xff] %v215
  %232 = vst [vmem:[#allocation2 + $0x30] sm:$0xff] %v216
  %233 = vst [vmem:[#allocation2 + $0x38] sm:$0xff] %v217
  %234 = vst [vmem:[#allocation2 + $0x40] sm:$0xff] %v218
  %235 = vst [vmem:[#allocation2 + $0x48] sm:$0xff] %v219
  %236 = vst [vmem:[#allocation2 + $0x50] sm:$0xff] %v220
  %237 = vst [vmem:[#allocation2 + $0x58] sm:$0xff] %v221
  %238 = vst [vmem:[#allocation2 + $0x60] sm:$0xff] %v222
  %239 = vst [vmem:[#allocation2 + $0x68] sm:$0xff] %v223
  %240 = vst [vmem:[#allocation2 + $0x70] sm:$0xff] %v224
  %241 = vst [vmem:[#allocation2 + $0x78] sm:$0xff] %v225
  // Predicated region
  $region22: #{gcn_encoder.5} parent=0 // pred_check
    %p242 = pneg %p17
  $region23: #{gcn_encoder.5} parent=0 // pred_check_branch
    %244 = sbr.rel (%p242) target = $region25
  $region24: #{gcn_encoder.5} parent=0 // pred_region
    %v245 = vld [vmem:[#allocation2] sm:$0xff]
    %v246 = vld [vmem:[#allocation2 + $0x8] sm:$0xff]
    %v247 = vld [vmem:[#allocation2 + $0x10] sm:$0xff]
    %v248 = vld [vmem:[#allocation2 + $0x18] sm:$0xff]
    %v249 = vld [vmem:[#allocation2 + $0x20] sm:$0xff]
    %v250 = vld [vmem:[#allocation2 + $0x28] sm:$0xff]
    %v251 = vld [vmem:[#allocation2 + $0x30] sm:$0xff]
    %v252 = vld [vmem:[#allocation2 + $0x38] sm:$0xff]
    %v253 = vld [vmem:[#allocation2 + $0x40] sm:$0xff]
    %v254 = vld [vmem:[#allocation2 + $0x48] sm:$0xff]
    %v255 = vld [vmem:[#allocation2 + $0x50] sm:$0xff]
    %v256 = vld [vmem:[#allocation2 + $0x58] sm:$0xff]
    %v257 = vld [vmem:[#allocation2 + $0x60] sm:$0xff]
    %v258 = vld [vmem:[#allocation2 + $0x68] sm:$0xff]
    %v259 = vld [vmem:[#allocation2 + $0x70] sm:$0xff]
    %v260 = vld [vmem:[#allocation2 + $0x78] sm:$0xff]
    %v261 = vld [vmem:[%s2] sm:$0xff]
    %v262 = vld [vmem:[%s2 + $0x8] sm:$0xff]
    %v263 = vld [vmem:[%s2 + $0x10] sm:$0xff]
    %v264 = vld [vmem:[%s2 + $0x18] sm:$0xff]
    %v265 = vld [vmem:[%s2 + $0x20] sm:$0xff]
    %v266 = vld [vmem:[%s2 + $0x28] sm:$0xff]
    %v267 = vld [vmem:[%s2 + $0x30] sm:$0xff]
    %v268 = vld [vmem:[%s2 + $0x38] sm:$0xff]
    %v269 = vld [vmem:[%s2 + $0x40] sm:$0xff]
    %v270 = vld [vmem:[%s2 + $0x48] sm:$0xff]
    %v271 = vld [vmem:[%s2 + $0x50] sm:$0xff]
    %v272 = vld [vmem:[%s2 + $0x58] sm:$0xff]
    %v273 = vld [vmem:[%s2 + $0x60] sm:$0xff]
    %v274 = vld [vmem:[%s2 + $0x68] sm:$0xff]
    %v275 = vld [vmem:[%s2 + $0x70] sm:$0xff]
    %v276 = vld [vmem:[%s2 + $0x78] sm:$0xff]
    %278 = vset.pattern.permute.xlu0 0
    %279 = vperm.xlu0 %278, %v261
    %v280 = vpop.permute.xlu0 %279
    %283 = vset.pattern.permute.xlu0 0
    %284 = vperm.xlu0 %283, %v262
    %v285 = vpop.permute.xlu0 %284
    %288 = vset.pattern.permute.xlu0 0
    %289 = vperm.xlu0 %288, %v263
    %v290 = vpop.permute.xlu0 %289
    %293 = vset.pattern.permute.xlu0 0
    %294 = vperm.xlu0 %293, %v264
    %v295 = vpop.permute.xlu0 %294
    %298 = vset.pattern.permute.xlu0 0
    %299 = vperm.xlu0 %298, %v265
    %v300 = vpop.permute.xlu0 %299
    %303 = vset.pattern.permute.xlu0 0
    %304 = vperm.xlu0 %303, %v266
    %v305 = vpop.permute.xlu0 %304
    %308 = vset.pattern.permute.xlu0 0
    %309 = vperm.xlu0 %308, %v267
    %v310 = vpop.permute.xlu0 %309
    %313 = vset.pattern.permute.xlu0 0
    %314 = vperm.xlu0 %313, %v268
    %v315 = vpop.permute.xlu0 %314
    %318 = vset.pattern.permute.xlu0 0
    %319 = vperm.xlu0 %318, %v269
    %v320 = vpop.permute.xlu0 %319
    %323 = vset.pattern.permute.xlu0 0
    %324 = vperm.xlu0 %323, %v270
    %v325 = vpop.permute.xlu0 %324
    %328 = vset.pattern.permute.xlu0 0
    %329 = vperm.xlu0 %328, %v271
    %v330 = vpop.permute.xlu0 %329
    %333 = vset.pattern.permute.xlu0 0
    %334 = vperm.xlu0 %333, %v272
    %v335 = vpop.permute.xlu0 %334
    %338 = vset.pattern.permute.xlu0 0
    %339 = vperm.xlu0 %338, %v273
    %v340 = vpop.permute.xlu0 %339
    %343 = vset.pattern.permute.xlu0 0
    %344 = vperm.xlu0 %343, %v274
    %v345 = vpop.permute.xlu0 %344
    %348 = vset.pattern.permute.xlu0 0
    %349 = vperm.xlu0 %348, %v275
    %v350 = vpop.permute.xlu0 %349
    %353 = vset.pattern.permute.xlu0 0
    %354 = vperm.xlu0 %353, %v276
    %v355 = vpop.permute.xlu0 %354
    %v357 = vmul.f32 %v245, %v280
    %v358 = vmul.f32 %v246, %v285
    %v359 = vmul.f32 %v247, %v290
    %v360 = vmul.f32 %v248, %v295
    %v361 = vmul.f32 %v249, %v300
    %v362 = vmul.f32 %v250, %v305
    %v363 = vmul.f32 %v251, %v310
    %v364 = vmul.f32 %v252, %v315
    %v365 = vmul.f32 %v253, %v320
    %v366 = vmul.f32 %v254, %v325
    %v367 = vmul.f32 %v255, %v330
    %v368 = vmul.f32 %v256, %v335
    %v369 = vmul.f32 %v257, %v340
    %v370 = vmul.f32 %v258, %v345
    %v371 = vmul.f32 %v259, %v350
    %v372 = vmul.f32 %v260, %v355
    %v373 = vld [vmem:[%s3] sm:$0x1]
    %v375 = vperm.slane %v373, 0
    %v377 = vadd.f32 %v357, %v375
    %v378 = vadd.f32 %v358, %v375
    %v379 = vadd.f32 %v359, %v375
    %v380 = vadd.f32 %v360, %v375
    %v381 = vadd.f32 %v361, %v375
    %v382 = vadd.f32 %v362, %v375
    %v383 = vadd.f32 %v363, %v375
    %v384 = vadd.f32 %v364, %v375
    %v385 = vadd.f32 %v365, %v375
    %v386 = vadd.f32 %v366, %v375
    %v387 = vadd.f32 %v367, %v375
    %v388 = vadd.f32 %v368, %v375
    %v389 = vadd.f32 %v369, %v375
    %v390 = vadd.f32 %v370, %v375
    %v391 = vadd.f32 %v371, %v375
    %v392 = vadd.f32 %v372, %v375
    %v393 = vmax.f32 %v377, 0.0
    %v394 = vmax.f32 %v378, 0.0
    %v395 = vmax.f32 %v379, 0.0
    %v396 = vmax.f32 %v380, 0.0
    %v397 = vmax.f32 %v381, 0.0
    %v398 = vmax.f32 %v382, 0.0
    %v399 = vmax.f32 %v383, 0.0
    %v400 = vmax.f32 %v384, 0.0
    %v401 = vmax.f32 %v385, 0.0
    %v402 = vmax.f32 %v386, 0.0
    %v403 = vmax.f32 %v387, 0.0
    %v404 = vmax.f32 %v388, 0.0
    %v405 = vmax.f32 %v389, 0.0
    %v406 = vmax.f32 %v390, 0.0
    %v407 = vmax.f32 %v391, 0.0
    %v408 = vmax.f32 %v392, 0.0
    %v409 = vpack.c.bf16 %v393, %v393
    %v410 = vpack.c.bf16 %v394, %v394
    %v411 = vpack.c.bf16 %v395, %v395
    %v412 = vpack.c.bf16 %v396, %v396
    %v413 = vpack.c.bf16 %v397, %v397
    %v414 = vpack.c.bf16 %v398, %v398
    %v415 = vpack.c.bf16 %v399, %v399
    %v416 = vpack.c.bf16 %v400, %v400
    %v417 = vpack.c.bf16 %v401, %v401
    %v418 = vpack.c.bf16 %v402, %v402
    %v419 = vpack.c.bf16 %v403, %v403
    %v420 = vpack.c.bf16 %v404, %v404
    %v421 = vpack.c.bf16 %v405, %v405
    %v422 = vpack.c.bf16 %v406, %v406
    %v423 = vpack.c.bf16 %v407, %v407
    %v424 = vpack.c.bf16 %v408, %v408
    %425 = vst [vmem:[%s4] sm:$0xf] %v409
    %426 = vst [vmem:[%s4 + $0x4] sm:$0xf] %v410
    %427 = vst [vmem:[%s4 + $0x8] sm:$0xf] %v411
    %428 = vst [vmem:[%s4 + $0xc] sm:$0xf] %v412
    %429 = vst [vmem:[%s4 + $0x10] sm:$0xf] %v413
    %430 = vst [vmem:[%s4 + $0x14] sm:$0xf] %v414
    %431 = vst [vmem:[%s4 + $0x18] sm:$0xf] %v415
    %432 = vst [vmem:[%s4 + $0x1c] sm:$0xf] %v416
    %433 = vst [vmem:[%s4 + $0x20] sm:$0xf] %v417
    %434 = vst [vmem:[%s4 + $0x24] sm:$0xf] %v418
    %435 = vst [vmem:[%s4 + $0x28] sm:$0xf] %v419
    %436 = vst [vmem:[%s4 + $0x2c] sm:$0xf] %v420
    %437 = vst [vmem:[%s4 + $0x30] sm:$0xf] %v421
    %438 = vst [vmem:[%s4 + $0x34] sm:$0xf] %v422
    %439 = vst [vmem:[%s4 + $0x38] sm:$0xf] %v423
    %440 = vst [vmem:[%s4 + $0x3c] sm:$0xf] %v424
  $region25: #{gcn_encoder.5} parent=0 // pred_fallthru
    _
  // Predicated region
  $region26: #{gcn_encoder.5} parent=0 // pred_check
    _
  $region27: #{gcn_encoder.5} parent=0 // pred_check_branch
    %442 = sbr.rel (0) target = $region29
  $region28: #{gcn_encoder.5} parent=0 // pred_region
    _
  $region29: #{gcn_encoder.5} parent=0 // pred_fallthru
    _
  // Predicated region
  $region30: #{gcn_encoder.5} parent=0 // pred_check
    _
  $region31: #{gcn_encoder.5} parent=0 // pred_check_branch
    %444 = sbr.rel (0) target = $region33
  $region32: #{gcn_encoder.5} parent=0 // pred_region
    _
  $region33: #{gcn_encoder.5} parent=0 // pred_fallthru
    _

// kernel: gcn_encoder.4
$region0: #{gcn_encoder.4}
  #allocation0 [shape = 'u32[]', space=smem, size = 0x4, offset = 0x4, fixed_abs, tag = 'smem constant byte address 0x4 - core index']
  #allocation1 [shape = 'u32[72,128]{1,0:T(1,128)}', space=vmem, size = 0x9000, scoped, tag = 'internal scratch']
  %s0 = inlined_call_operand.vmem [shape: bf16[128,128], index: 0, kind: input, shape index: {}]
  %s1 = inlined_call_operand.vmem [shape: bf16[128,128], index: 1, kind: input, shape index: {}]
  %s2 = inlined_call_operand.vmem [shape: f32[128,1], index: 2, kind: input, shape index: {}]
  %s3 = inlined_call_operand.vmem [shape: bf16[128,128], index: 3, kind: output, shape index: {}]
  %s4 = sld [smem:[#allocation0]]
  $region22: #{gcn_encoder.4} parent=0
    _
  %s6 = ssub.s32 1, %s4
  %s7 = scalar_select 0, %s6, %s4
  // Predicated region
  $region2: #{gcn_encoder.4} parent=0 // pred_check
    _
  $region3: #{gcn_encoder.4} parent=0 // pred_check_branch
    %9 = sbr.rel (0) target = $region5
  $region4: #{gcn_encoder.4} parent=0 // pred_region
    _
  $region5: #{gcn_encoder.4} parent=0 // pred_fallthru
    _
  // Predicated region
  $region6: #{gcn_encoder.4} parent=0 // pred_check
    _
  $region7: #{gcn_encoder.4} parent=0 // pred_check_branch
    %11 = sbr.rel (0) target = $region9
  $region8: #{gcn_encoder.4} parent=0 // pred_region
    _
  $region9: #{gcn_encoder.4} parent=0 // pred_fallthru
    _
  // Predicated region
  $region10: #{gcn_encoder.4} parent=0 // pred_check
    _
  $region11: #{gcn_encoder.4} parent=0 // pred_check_branch
    %13 = sbr.rel (0) target = $region13
  $region12: #{gcn_encoder.4} parent=0 // pred_region
    _
  $region13: #{gcn_encoder.4} parent=0 // pred_fallthru
    _
  %v14 = vld [vmem:[%s0] sm:$0xf]
  %v15 = vld [vmem:[%s0 + $0x4] sm:$0xf]
  %v16 = vld [vmem:[%s0 + $0x8] sm:$0xf]
  %v17 = vld [vmem:[%s0 + $0xc] sm:$0xf]
  %v18 = vld [vmem:[%s0 + $0x10] sm:$0xf]
  %v19 = vld [vmem:[%s0 + $0x14] sm:$0xf]
  %v20 = vld [vmem:[%s0 + $0x18] sm:$0xf]
  %v21 = vld [vmem:[%s0 + $0x1c] sm:$0xf]
  %v22 = vld [vmem:[%s0 + $0x20] sm:$0xf]
  %v23 = vld [vmem:[%s0 + $0x24] sm:$0xf]
  %v24 = vld [vmem:[%s0 + $0x28] sm:$0xf]
  %v25 = vld [vmem:[%s0 + $0x2c] sm:$0xf]
  %v26 = vld [vmem:[%s0 + $0x30] sm:$0xf]
  %v27 = vld [vmem:[%s0 + $0x34] sm:$0xf]
  %v28 = vld [vmem:[%s0 + $0x38] sm:$0xf]
  %v29 = vld [vmem:[%s0 + $0x3c] sm:$0xf]
  %v30 = vld [vmem:[%s1] sm:$0xf]
  %v31 = vld [vmem:[%s1 + $0x4] sm:$0xf]
  %v32 = vld [vmem:[%s1 + $0x8] sm:$0xf]
  %v33 = vld [vmem:[%s1 + $0xc] sm:$0xf]
  %v34 = vld [vmem:[%s1 + $0x10] sm:$0xf]
  %v35 = vld [vmem:[%s1 + $0x14] sm:$0xf]
  %v36 = vld [vmem:[%s1 + $0x18] sm:$0xf]
  %v37 = vld [vmem:[%s1 + $0x1c] sm:$0xf]
  %v38 = vld [vmem:[%s1 + $0x20] sm:$0xf]
  %v39 = vld [vmem:[%s1 + $0x24] sm:$0xf]
  %v40 = vld [vmem:[%s1 + $0x28] sm:$0xf]
  %v41 = vld [vmem:[%s1 + $0x2c] sm:$0xf]
  %v42 = vld [vmem:[%s1 + $0x30] sm:$0xf]
  %v43 = vld [vmem:[%s1 + $0x34] sm:$0xf]
  %v44 = vld [vmem:[%s1 + $0x38] sm:$0xf]
  %v45 = vld [vmem:[%s1 + $0x3c] sm:$0xf]
  %v62 = vunpack.c.l.b16 %v14
  %v63 = vunpack.c.l.b16 %v15
  %v64 = vunpack.c.l.b16 %v16
  %v65 = vunpack.c.l.b16 %v17
  %v66 = vunpack.c.l.b16 %v18
  %v67 = vunpack.c.l.b16 %v19
  %v68 = vunpack.c.l.b16 %v20
  %v69 = vunpack.c.l.b16 %v21
  %v70 = vunpack.c.l.b16 %v22
  %v71 = vunpack.c.l.b16 %v23
  %v72 = vunpack.c.l.b16 %v24
  %v73 = vunpack.c.l.b16 %v25
  %v74 = vunpack.c.l.b16 %v26
  %v75 = vunpack.c.l.b16 %v27
  %v76 = vunpack.c.l.b16 %v28
  %v77 = vunpack.c.l.b16 %v29
  %v78 = vpack.c.b16 %v63, %v62
  %v79 = vpack.c.b16 %v65, %v64
  %v80 = vpack.c.b16 %v67, %v66
  %v81 = vpack.c.b16 %v69, %v68
  %v82 = vpack.c.b16 %v71, %v70
  %v83 = vpack.c.b16 %v73, %v72
  %v84 = vpack.c.b16 %v75, %v74
  %v85 = vpack.c.b16 %v77, %v76
  %v110 = vunpack.c.l.b16 %v30
  %v111 = vunpack.c.l.b16 %v31
  %v112 = vunpack.c.l.b16 %v32
  %v113 = vunpack.c.l.b16 %v33
  %v114 = vunpack.c.l.b16 %v34
  %v115 = vunpack.c.l.b16 %v35
  %v116 = vunpack.c.l.b16 %v36
  %v117 = vunpack.c.l.b16 %v37
  %v118 = vunpack.c.l.b16 %v38
  %v119 = vunpack.c.l.b16 %v39
  %v120 = vunpack.c.l.b16 %v40
  %v121 = vunpack.c.l.b16 %v41
  %v122 = vunpack.c.l.b16 %v42
  %v123 = vunpack.c.l.b16 %v43
  %v124 = vunpack.c.l.b16 %v44
  %v125 = vunpack.c.l.b16 %v45
  %v126 = vpack.c.b16 %v111, %v110
  %v127 = vpack.c.b16 %v113, %v112
  %v128 = vpack.c.b16 %v115, %v114
  %v129 = vpack.c.b16 %v117, %v116
  %v130 = vpack.c.b16 %v119, %v118
  %v131 = vpack.c.b16 %v121, %v120
  %v132 = vpack.c.b16 %v123, %v122
  %v133 = vpack.c.b16 %v125, %v124
  %142 = vmatpush.bf16.msra.mxu0 %v133
  %143 = vmatpush.bf16.msra.mxu0 %v132
  %144 = vmatpush.bf16.msra.mxu0 %v131
  %145 = vmatpush.bf16.msra.mxu0 %v130
  %146 = vmatpush.bf16.msra.mxu0 %v129
  %147 = vmatpush.bf16.msra.mxu0 %v128
  %148 = vmatpush.bf16.msra.mxu0 %v127
  %149 = vmatpush.bf16.msra.mxu0 %v126
  %150 = vmatmul.bf16.gmra.mxu0 %v78
  %v151 = vpop.f32.mrf.mxu0
  %v152 = vadd.f32 0.0, %v151
  %v153 = vpop.f32.mrf.mxu0
  %v154 = vadd.f32 0.0, %v153
  %155 = vmatmul.bf16.gmra.mxu0 %v79
  %v156 = vpop.f32.mrf.mxu0
  %v157 = vadd.f32 0.0, %v156
  %v158 = vpop.f32.mrf.mxu0
  %v159 = vadd.f32 0.0, %v158
  %160 = vmatmul.bf16.gmra.mxu0 %v80
  %v161 = vpop.f32.mrf.mxu0
  %v162 = vadd.f32 0.0, %v161
  %v163 = vpop.f32.mrf.mxu0
  %v164 = vadd.f32 0.0, %v163
  %165 = vmatmul.bf16.gmra.mxu0 %v81
  %v166 = vpop.f32.mrf.mxu0
  %v167 = vadd.f32 0.0, %v166
  %v168 = vpop.f32.mrf.mxu0
  %v169 = vadd.f32 0.0, %v168
  %170 = vmatmul.bf16.gmra.mxu0 %v82
  %v171 = vpop.f32.mrf.mxu0
  %v172 = vadd.f32 0.0, %v171
  %v173 = vpop.f32.mrf.mxu0
  %v174 = vadd.f32 0.0, %v173
  %175 = vmatmul.bf16.gmra.mxu0 %v83
  %v176 = vpop.f32.mrf.mxu0
  %v177 = vadd.f32 0.0, %v176
  %v178 = vpop.f32.mrf.mxu0
  %v179 = vadd.f32 0.0, %v178
  %180 = vmatmul.bf16.gmra.mxu0 %v84
  %v181 = vpop.f32.mrf.mxu0
  %v182 = vadd.f32 0.0, %v181
  %v183 = vpop.f32.mrf.mxu0
  %v184 = vadd.f32 0.0, %v183
  %185 = vmatmul.bf16.gmra.mxu0 %v85
  %v186 = vpop.f32.mrf.mxu0
  %v187 = vadd.f32 0.0, %v186
  %v188 = vpop.f32.mrf.mxu0
  %v189 = vadd.f32 0.0, %v188
  %190 = vdwg.mxu0
  %v191 = vld [vmem:[%s2] sm:$0xff]
  %v192 = vld [vmem:[%s2 + $0x8] sm:$0xff]
  %v193 = vld [vmem:[%s2 + $0x10] sm:$0xff]
  %v194 = vld [vmem:[%s2 + $0x18] sm:$0xff]
  %v195 = vld [vmem:[%s2 + $0x20] sm:$0xff]
  %v196 = vld [vmem:[%s2 + $0x28] sm:$0xff]
  %v197 = vld [vmem:[%s2 + $0x30] sm:$0xff]
  %v198 = vld [vmem:[%s2 + $0x38] sm:$0xff]
  %v199 = vld [vmem:[%s2 + $0x40] sm:$0xff]
  %v200 = vld [vmem:[%s2 + $0x48] sm:$0xff]
  %v201 = vld [vmem:[%s2 + $0x50] sm:$0xff]
  %v202 = vld [vmem:[%s2 + $0x58] sm:$0xff]
  %v203 = vld [vmem:[%s2 + $0x60] sm:$0xff]
  %v204 = vld [vmem:[%s2 + $0x68] sm:$0xff]
  %v205 = vld [vmem:[%s2 + $0x70] sm:$0xff]
  %v206 = vld [vmem:[%s2 + $0x78] sm:$0xff]
  %208 = vset.pattern.permute.xlu0 0
  %209 = vperm.xlu0 %208, %v191
  %v210 = vpop.permute.xlu0 %209
  %213 = vset.pattern.permute.xlu0 0
  %214 = vperm.xlu0 %213, %v192
  %v215 = vpop.permute.xlu0 %214
  %218 = vset.pattern.permute.xlu0 0
  %219 = vperm.xlu0 %218, %v193
  %v220 = vpop.permute.xlu0 %219
  %223 = vset.pattern.permute.xlu0 0
  %224 = vperm.xlu0 %223, %v194
  %v225 = vpop.permute.xlu0 %224
  %228 = vset.pattern.permute.xlu0 0
  %229 = vperm.xlu0 %228, %v195
  %v230 = vpop.permute.xlu0 %229
  %233 = vset.pattern.permute.xlu0 0
  %234 = vperm.xlu0 %233, %v196
  %v235 = vpop.permute.xlu0 %234
  %238 = vset.pattern.permute.xlu0 0
  %239 = vperm.xlu0 %238, %v197
  %v240 = vpop.permute.xlu0 %239
  %243 = vset.pattern.permute.xlu0 0
  %244 = vperm.xlu0 %243, %v198
  %v245 = vpop.permute.xlu0 %244
  %248 = vset.pattern.permute.xlu0 0
  %249 = vperm.xlu0 %248, %v199
  %v250 = vpop.permute.xlu0 %249
  %253 = vset.pattern.permute.xlu0 0
  %254 = vperm.xlu0 %253, %v200
  %v255 = vpop.permute.xlu0 %254
  %258 = vset.pattern.permute.xlu0 0
  %259 = vperm.xlu0 %258, %v201
  %v260 = vpop.permute.xlu0 %259
  %263 = vset.pattern.permute.xlu0 0
  %264 = vperm.xlu0 %263, %v202
  %v265 = vpop.permute.xlu0 %264
  %268 = vset.pattern.permute.xlu0 0
  %269 = vperm.xlu0 %268, %v203
  %v270 = vpop.permute.xlu0 %269
  %273 = vset.pattern.permute.xlu0 0
  %274 = vperm.xlu0 %273, %v204
  %v275 = vpop.permute.xlu0 %274
  %278 = vset.pattern.permute.xlu0 0
  %279 = vperm.xlu0 %278, %v205
  %v280 = vpop.permute.xlu0 %279
  %283 = vset.pattern.permute.xlu0 0
  %284 = vperm.xlu0 %283, %v206
  %v285 = vpop.permute.xlu0 %284
  %v287 = vmul.f32 %v152, %v210
  %v288 = vmul.f32 %v154, %v215
  %v289 = vmul.f32 %v157, %v220
  %v290 = vmul.f32 %v159, %v225
  %v291 = vmul.f32 %v162, %v230
  %v292 = vmul.f32 %v164, %v235
  %v293 = vmul.f32 %v167, %v240
  %v294 = vmul.f32 %v169, %v245
  %v295 = vmul.f32 %v172, %v250
  %v296 = vmul.f32 %v174, %v255
  %v297 = vmul.f32 %v177, %v260
  %v298 = vmul.f32 %v179, %v265
  %v299 = vmul.f32 %v182, %v270
  %v300 = vmul.f32 %v184, %v275
  %v301 = vmul.f32 %v187, %v280
  %v302 = vmul.f32 %v189, %v285
  %v303 = vpack.c.bf16 %v287, %v287
  %v304 = vpack.c.bf16 %v288, %v288
  %v305 = vpack.c.bf16 %v289, %v289
  %v306 = vpack.c.bf16 %v290, %v290
  %v307 = vpack.c.bf16 %v291, %v291
  %v308 = vpack.c.bf16 %v292, %v292
  %v309 = vpack.c.bf16 %v293, %v293
  %v310 = vpack.c.bf16 %v294, %v294
  %v311 = vpack.c.bf16 %v295, %v295
  %v312 = vpack.c.bf16 %v296, %v296
  %v313 = vpack.c.bf16 %v297, %v297
  %v314 = vpack.c.bf16 %v298, %v298
  %v315 = vpack.c.bf16 %v299, %v299
  %v316 = vpack.c.bf16 %v300, %v300
  %v317 = vpack.c.bf16 %v301, %v301
  %v318 = vpack.c.bf16 %v302, %v302
  %319 = vst [vmem:[%s3] sm:$0xf] %v303
  %320 = vst [vmem:[%s3 + $0x4] sm:$0xf] %v304
  %321 = vst [vmem:[%s3 + $0x8] sm:$0xf] %v305
  %322 = vst [vmem:[%s3 + $0xc] sm:$0xf] %v306
  %323 = vst [vmem:[%s3 + $0x10] sm:$0xf] %v307
  %324 = vst [vmem:[%s3 + $0x14] sm:$0xf] %v308
  %325 = vst [vmem:[%s3 + $0x18] sm:$0xf] %v309
  %326 = vst [vmem:[%s3 + $0x1c] sm:$0xf] %v310
  %327 = vst [vmem:[%s3 + $0x20] sm:$0xf] %v311
  %328 = vst [vmem:[%s3 + $0x24] sm:$0xf] %v312
  %329 = vst [vmem:[%s3 + $0x28] sm:$0xf] %v313
  %330 = vst [vmem:[%s3 + $0x2c] sm:$0xf] %v314
  %331 = vst [vmem:[%s3 + $0x30] sm:$0xf] %v315
  %332 = vst [vmem:[%s3 + $0x34] sm:$0xf] %v316
  %333 = vst [vmem:[%s3 + $0x38] sm:$0xf] %v317
  %334 = vst [vmem:[%s3 + $0x3c] sm:$0xf] %v318
  // Predicated region
  $region14: #{gcn_encoder.4} parent=0 // pred_check
    _
  $region15: #{gcn_encoder.4} parent=0 // pred_check_branch
    %336 = sbr.rel (0) target = $region17
  $region16: #{gcn_encoder.4} parent=0 // pred_region
    _
  $region17: #{gcn_encoder.4} parent=0 // pred_fallthru
    _
  // Predicated region
  $region18: #{gcn_encoder.4} parent=0 // pred_check
    _
  $region19: #{gcn_encoder.4} parent=0 // pred_check_branch
    %338 = sbr.rel (0) target = $region21
  $region20: #{gcn_encoder.4} parent=0 // pred_region
    _
  $region21: #{gcn_encoder.4} parent=0 // pred_fallthru
    _

// kernel: gcn_encoder.7
$region0: #{gcn_encoder.7}
  #allocation0 [shape = 'u32[]', space=smem, size = 0x4, offset = 0x4, fixed_abs, tag = 'smem constant byte address 0x4 - core index']
  #allocation1 [shape = 'u32[72,128]{1,0:T(1,128)}', space=vmem, size = 0x9000, scoped, tag = 'internal scratch']
  #allocation2 [shape = 'f32[128,128]{1,0:T(8,128)}', space=vmem, size = 0x10000, scoped, tag = 'scratch operand']
  %s0 = inlined_call_operand.vmem [shape: s8[128,128], index: 0, kind: input, shape index: {}]
  %s1 = inlined_call_operand.vmem [shape: bf16[128,128], index: 1, kind: input, shape index: {}]
  %s2 = inlined_call_operand.vmem [shape: f32[128,1], index: 2, kind: input, shape index: {}]
  %s3 = inlined_call_operand.vmem [shape: f32[1,128], index: 3, kind: input, shape index: {}]
  %s4 = inlined_call_operand.vmem [shape: f32[128,128], index: 4, kind: output, shape index: {}]
  %s5 = sld [smem:[#allocation0]]
  $region34: #{gcn_encoder.7} parent=0
    _
  %s7 = ssub.s32 1, %s5
  %s8 = scalar_select 0, %s7, %s5
  // Predicated region
  $region2: #{gcn_encoder.7} parent=0 // pred_check
    _
  $region3: #{gcn_encoder.7} parent=0 // pred_check_branch
    %10 = sbr.rel (0) target = $region5
  $region4: #{gcn_encoder.7} parent=0 // pred_region
    _
  $region5: #{gcn_encoder.7} parent=0 // pred_fallthru
    _
  // Predicated region
  $region6: #{gcn_encoder.7} parent=0 // pred_check
    _
  $region7: #{gcn_encoder.7} parent=0 // pred_check_branch
    %12 = sbr.rel (0) target = $region9
  $region8: #{gcn_encoder.7} parent=0 // pred_region
    _
  $region9: #{gcn_encoder.7} parent=0 // pred_fallthru
    _
  // Predicated region
  $region10: #{gcn_encoder.7} parent=0 // pred_check
    _
  $region11: #{gcn_encoder.7} parent=0 // pred_check_branch
    %14 = sbr.rel (0) target = $region13
  $region12: #{gcn_encoder.7} parent=0 // pred_region
    _
  $region13: #{gcn_encoder.7} parent=0 // pred_fallthru
    _
  // Predicated region
  $region14: #{gcn_encoder.7} parent=0 // pred_check
    _
  $region15: #{gcn_encoder.7} parent=0 // pred_check_branch
    %16 = sbr.rel (0) target = $region17
  $region16: #{gcn_encoder.7} parent=0 // pred_region
    _
  $region17: #{gcn_encoder.7} parent=0 // pred_fallthru
    _
  %p17 = scmp.eq.s32.totalorder 0, 0
  // Predicated region
  $region18: #{gcn_encoder.7} parent=0 // pred_check
    %p18 = pneg %p17
  $region19: #{gcn_encoder.7} parent=0 // pred_check_branch
    %20 = sbr.rel (%p18) target = $region21
  $region20: #{gcn_encoder.7} parent=0 // pred_region
    %21 = vst [vmem:[#allocation2] sm:$0xff] 0.0
    %22 = vst [vmem:[#allocation2 + $0x8] sm:$0xff] 0.0
    %23 = vst [vmem:[#allocation2 + $0x10] sm:$0xff] 0.0
    %24 = vst [vmem:[#allocation2 + $0x18] sm:$0xff] 0.0
    %25 = vst [vmem:[#allocation2 + $0x20] sm:$0xff] 0.0
    %26 = vst [vmem:[#allocation2 + $0x28] sm:$0xff] 0.0
    %27 = vst [vmem:[#allocation2 + $0x30] sm:$0xff] 0.0
    %28 = vst [vmem:[#allocation2 + $0x38] sm:$0xff] 0.0
    %29 = vst [vmem:[#allocation2 + $0x40] sm:$0xff] 0.0
    %30 = vst [vmem:[#allocation2 + $0x48] sm:$0xff] 0.0
    %31 = vst [vmem:[#allocation2 + $0x50] sm:$0xff] 0.0
    %32 = vst [vmem:[#allocation2 + $0x58] sm:$0xff] 0.0
    %33 = vst [vmem:[#allocation2 + $0x60] sm:$0xff] 0.0
    %34 = vst [vmem:[#allocation2 + $0x68] sm:$0xff] 0.0
    %35 = vst [vmem:[#allocation2 + $0x70] sm:$0xff] 0.0
    %36 = vst [vmem:[#allocation2 + $0x78] sm:$0xff] 0.0
  $region21: #{gcn_encoder.7} parent=0 // pred_fallthru
    _
  %v37 = vld [vmem:[%s0] sm:$0xff]
  %v38 = vld [vmem:[%s0 + $0x8] sm:$0xff]
  %v39 = vld [vmem:[%s0 + $0x10] sm:$0xff]
  %v40 = vld [vmem:[%s0 + $0x18] sm:$0xff]
  %v41 = vunpack.c.0.s8 %v37
  %v42 = vunpack.c.1.s8 %v37
  %v43 = vunpack.c.2.s8 %v37
  %v44 = vunpack.c.3.s8 %v37
  %v45 = vunpack.c.0.s8 %v38
  %v46 = vunpack.c.1.s8 %v38
  %v47 = vunpack.c.2.s8 %v38
  %v48 = vunpack.c.3.s8 %v38
  %v49 = vunpack.c.0.s8 %v39
  %v50 = vunpack.c.1.s8 %v39
  %v51 = vunpack.c.2.s8 %v39
  %v52 = vunpack.c.3.s8 %v39
  %v53 = vunpack.c.0.s8 %v40
  %v54 = vunpack.c.1.s8 %v40
  %v55 = vunpack.c.2.s8 %v40
  %v56 = vunpack.c.3.s8 %v40
  %v57 = vcvt.s32.f32 %v41
  %v58 = vcvt.s32.f32 %v42
  %v59 = vcvt.s32.f32 %v43
  %v60 = vcvt.s32.f32 %v44
  %v61 = vcvt.s32.f32 %v45
  %v62 = vcvt.s32.f32 %v46
  %v63 = vcvt.s32.f32 %v47
  %v64 = vcvt.s32.f32 %v48
  %v65 = vcvt.s32.f32 %v49
  %v66 = vcvt.s32.f32 %v50
  %v67 = vcvt.s32.f32 %v51
  %v68 = vcvt.s32.f32 %v52
  %v69 = vcvt.s32.f32 %v53
  %v70 = vcvt.s32.f32 %v54
  %v71 = vcvt.s32.f32 %v55
  %v72 = vcvt.s32.f32 %v56
  %v73 = vpack.c.bf16 %v58, %v57
  %v74 = vpack.c.bf16 %v60, %v59
  %v75 = vpack.c.bf16 %v62, %v61
  %v76 = vpack.c.bf16 %v64, %v63
  %v77 = vpack.c.bf16 %v66, %v65
  %v78 = vpack.c.bf16 %v68, %v67
  %v79 = vpack.c.bf16 %v70, %v69
  %v80 = vpack.c.bf16 %v72, %v71
  %v81 = vld [vmem:[#allocation2] sm:$0xff]
  %v82 = vld [vmem:[#allocation2 + $0x8] sm:$0xff]
  %v83 = vld [vmem:[#allocation2 + $0x10] sm:$0xff]
  %v84 = vld [vmem:[#allocation2 + $0x18] sm:$0xff]
  %v85 = vld [vmem:[#allocation2 + $0x20] sm:$0xff]
  %v86 = vld [vmem:[#allocation2 + $0x28] sm:$0xff]
  %v87 = vld [vmem:[#allocation2 + $0x30] sm:$0xff]
  %v88 = vld [vmem:[#allocation2 + $0x38] sm:$0xff]
  %v89 = vld [vmem:[#allocation2 + $0x40] sm:$0xff]
  %v90 = vld [vmem:[#allocation2 + $0x48] sm:$0xff]
  %v91 = vld [vmem:[#allocation2 + $0x50] sm:$0xff]
  %v92 = vld [vmem:[#allocation2 + $0x58] sm:$0xff]
  %v93 = vld [vmem:[#allocation2 + $0x60] sm:$0xff]
  %v94 = vld [vmem:[#allocation2 + $0x68] sm:$0xff]
  %v95 = vld [vmem:[#allocation2 + $0x70] sm:$0xff]
  %v96 = vld [vmem:[#allocation2 + $0x78] sm:$0xff]
  %v97 = vld [vmem:[%s1] sm:$0xf]
  %v98 = vld [vmem:[%s1 + $0x4] sm:$0xf]
  %v99 = vld [vmem:[%s1 + $0x8] sm:$0xf]
  %v100 = vld [vmem:[%s1 + $0xc] sm:$0xf]
  %v101 = vld [vmem:[%s1 + $0x10] sm:$0xf]
  %v102 = vld [vmem:[%s1 + $0x14] sm:$0xf]
  %v103 = vld [vmem:[%s1 + $0x18] sm:$0xf]
  %v104 = vld [vmem:[%s1 + $0x1c] sm:$0xf]
  %v105 = vld [vmem:[%s1 + $0x20] sm:$0xf]
  %v106 = vld [vmem:[%s1 + $0x24] sm:$0xf]
  %v107 = vld [vmem:[%s1 + $0x28] sm:$0xf]
  %v108 = vld [vmem:[%s1 + $0x2c] sm:$0xf]
  %v109 = vld [vmem:[%s1 + $0x30] sm:$0xf]
  %v110 = vld [vmem:[%s1 + $0x34] sm:$0xf]
  %v111 = vld [vmem:[%s1 + $0x38] sm:$0xf]
  %v112 = vld [vmem:[%s1 + $0x3c] sm:$0xf]
  %v129 = vunpack.c.l.b16 %v97
  %v130 = vunpack.c.l.b16 %v98
  %v131 = vunpack.c.l.b16 %v99
  %v132 = vunpack.c.l.b16 %v100
  %v133 = vunpack.c.l.b16 %v101
  %v134 = vunpack.c.l.b16 %v102
  %v135 = vunpack.c.l.b16 %v103
  %v136 = vunpack.c.l.b16 %v104
  %v137 = vunpack.c.l.b16 %v105
  %v138 = vunpack.c.l.b16 %v106
  %v139 = vunpack.c.l.b16 %v107
  %v140 = vunpack.c.l.b16 %v108
  %v141 = vunpack.c.l.b16 %v109
  %v142 = vunpack.c.l.b16 %v110
  %v143 = vunpack.c.l.b16 %v111
  %v144 = vunpack.c.l.b16 %v112
  %v145 = vpack.c.b16 %v130, %v129
  %v146 = vpack.c.b16 %v132, %v131
  %v147 = vpack.c.b16 %v134, %v133
  %v148 = vpack.c.b16 %v136, %v135
  %v149 = vpack.c.b16 %v138, %v137
  %v150 = vpack.c.b16 %v140, %v139
  %v151 = vpack.c.b16 %v142, %v141
  %v152 = vpack.c.b16 %v144, %v143
  %161 = vmatpush.bf16.msra.mxu0 %v152
  %162 = vmatpush.bf16.msra.mxu0 %v151
  %163 = vmatpush.bf16.msra.mxu0 %v150
  %164 = vmatpush.bf16.msra.mxu0 %v149
  %165 = vmatpush.bf16.msra.mxu0 %v148
  %166 = vmatpush.bf16.msra.mxu0 %v147
  %167 = vmatpush.bf16.msra.mxu0 %v146
  %168 = vmatpush.bf16.msra.mxu0 %v145
  %169 = vmatmul.bf16.gmra.mxu0 %v73
  %v170 = vpop.f32.mrf.mxu0
  %v171 = vadd.f32 0.0, %v170
  %v172 = vpop.f32.mrf.mxu0
  %v173 = vadd.f32 0.0, %v172
  %174 = vmatmul.bf16.gmra.mxu0 %v74
  %v175 = vpop.f32.mrf.mxu0
  %v176 = vadd.f32 0.0, %v175
  %v177 = vpop.f32.mrf.mxu0
  %v178 = vadd.f32 0.0, %v177
  %179 = vmatmul.bf16.gmra.mxu0 %v75
  %v180 = vpop.f32.mrf.mxu0
  %v181 = vadd.f32 0.0, %v180
  %v182 = vpop.f32.mrf.mxu0
  %v183 = vadd.f32 0.0, %v182
  %184 = vmatmul.bf16.gmra.mxu0 %v76
  %v185 = vpop.f32.mrf.mxu0
  %v186 = vadd.f32 0.0, %v185
  %v187 = vpop.f32.mrf.mxu0
  %v188 = vadd.f32 0.0, %v187
  %189 = vmatmul.bf16.gmra.mxu0 %v77
  %v190 = vpop.f32.mrf.mxu0
  %v191 = vadd.f32 0.0, %v190
  %v192 = vpop.f32.mrf.mxu0
  %v193 = vadd.f32 0.0, %v192
  %194 = vmatmul.bf16.gmra.mxu0 %v78
  %v195 = vpop.f32.mrf.mxu0
  %v196 = vadd.f32 0.0, %v195
  %v197 = vpop.f32.mrf.mxu0
  %v198 = vadd.f32 0.0, %v197
  %199 = vmatmul.bf16.gmra.mxu0 %v79
  %v200 = vpop.f32.mrf.mxu0
  %v201 = vadd.f32 0.0, %v200
  %v202 = vpop.f32.mrf.mxu0
  %v203 = vadd.f32 0.0, %v202
  %204 = vmatmul.bf16.gmra.mxu0 %v80
  %v205 = vpop.f32.mrf.mxu0
  %v206 = vadd.f32 0.0, %v205
  %v207 = vpop.f32.mrf.mxu0
  %v208 = vadd.f32 0.0, %v207
  %209 = vdwg.mxu0
  %v210 = vadd.f32 %v81, %v171
  %v211 = vadd.f32 %v82, %v173
  %v212 = vadd.f32 %v83, %v176
  %v213 = vadd.f32 %v84, %v178
  %v214 = vadd.f32 %v85, %v181
  %v215 = vadd.f32 %v86, %v183
  %v216 = vadd.f32 %v87, %v186
  %v217 = vadd.f32 %v88, %v188
  %v218 = vadd.f32 %v89, %v191
  %v219 = vadd.f32 %v90, %v193
  %v220 = vadd.f32 %v91, %v196
  %v221 = vadd.f32 %v92, %v198
  %v222 = vadd.f32 %v93, %v201
  %v223 = vadd.f32 %v94, %v203
  %v224 = vadd.f32 %v95, %v206
  %v225 = vadd.f32 %v96, %v208
  %226 = vst [vmem:[#allocation2] sm:$0xff] %v210
  %227 = vst [vmem:[#allocation2 + $0x8] sm:$0xff] %v211
  %228 = vst [vmem:[#allocation2 + $0x10] sm:$0xff] %v212
  %229 = vst [vmem:[#allocation2 + $0x18] sm:$0xff] %v213
  %230 = vst [vmem:[#allocation2 + $0x20] sm:$0xff] %v214
  %231 = vst [vmem:[#allocation2 + $0x28] sm:$0xff] %v215
  %232 = vst [vmem:[#allocation2 + $0x30] sm:$0xff] %v216
  %233 = vst [vmem:[#allocation2 + $0x38] sm:$0xff] %v217
  %234 = vst [vmem:[#allocation2 + $0x40] sm:$0xff] %v218
  %235 = vst [vmem:[#allocation2 + $0x48] sm:$0xff] %v219
  %236 = vst [vmem:[#allocation2 + $0x50] sm:$0xff] %v220
  %237 = vst [vmem:[#allocation2 + $0x58] sm:$0xff] %v221
  %238 = vst [vmem:[#allocation2 + $0x60] sm:$0xff] %v222
  %239 = vst [vmem:[#allocation2 + $0x68] sm:$0xff] %v223
  %240 = vst [vmem:[#allocation2 + $0x70] sm:$0xff] %v224
  %241 = vst [vmem:[#allocation2 + $0x78] sm:$0xff] %v225
  // Predicated region
  $region22: #{gcn_encoder.7} parent=0 // pred_check
    %p242 = pneg %p17
  $region23: #{gcn_encoder.7} parent=0 // pred_check_branch
    %244 = sbr.rel (%p242) target = $region25
  $region24: #{gcn_encoder.7} parent=0 // pred_region
    %v245 = vld [vmem:[#allocation2] sm:$0xff]
    %v246 = vld [vmem:[#allocation2 + $0x8] sm:$0xff]
    %v247 = vld [vmem:[#allocation2 + $0x10] sm:$0xff]
    %v248 = vld [vmem:[#allocation2 + $0x18] sm:$0xff]
    %v249 = vld [vmem:[#allocation2 + $0x20] sm:$0xff]
    %v250 = vld [vmem:[#allocation2 + $0x28] sm:$0xff]
    %v251 = vld [vmem:[#allocation2 + $0x30] sm:$0xff]
    %v252 = vld [vmem:[#allocation2 + $0x38] sm:$0xff]
    %v253 = vld [vmem:[#allocation2 + $0x40] sm:$0xff]
    %v254 = vld [vmem:[#allocation2 + $0x48] sm:$0xff]
    %v255 = vld [vmem:[#allocation2 + $0x50] sm:$0xff]
    %v256 = vld [vmem:[#allocation2 + $0x58] sm:$0xff]
    %v257 = vld [vmem:[#allocation2 + $0x60] sm:$0xff]
    %v258 = vld [vmem:[#allocation2 + $0x68] sm:$0xff]
    %v259 = vld [vmem:[#allocation2 + $0x70] sm:$0xff]
    %v260 = vld [vmem:[#allocation2 + $0x78] sm:$0xff]
    %v261 = vld [vmem:[%s2] sm:$0xff]
    %v262 = vld [vmem:[%s2 + $0x8] sm:$0xff]
    %v263 = vld [vmem:[%s2 + $0x10] sm:$0xff]
    %v264 = vld [vmem:[%s2 + $0x18] sm:$0xff]
    %v265 = vld [vmem:[%s2 + $0x20] sm:$0xff]
    %v266 = vld [vmem:[%s2 + $0x28] sm:$0xff]
    %v267 = vld [vmem:[%s2 + $0x30] sm:$0xff]
    %v268 = vld [vmem:[%s2 + $0x38] sm:$0xff]
    %v269 = vld [vmem:[%s2 + $0x40] sm:$0xff]
    %v270 = vld [vmem:[%s2 + $0x48] sm:$0xff]
    %v271 = vld [vmem:[%s2 + $0x50] sm:$0xff]
    %v272 = vld [vmem:[%s2 + $0x58] sm:$0xff]
    %v273 = vld [vmem:[%s2 + $0x60] sm:$0xff]
    %v274 = vld [vmem:[%s2 + $0x68] sm:$0xff]
    %v275 = vld [vmem:[%s2 + $0x70] sm:$0xff]
    %v276 = vld [vmem:[%s2 + $0x78] sm:$0xff]
    %278 = vset.pattern.permute.xlu0 0
    %279 = vperm.xlu0 %278, %v261
    %v280 = vpop.permute.xlu0 %279
    %283 = vset.pattern.permute.xlu0 0
    %284 = vperm.xlu0 %283, %v262
    %v285 = vpop.permute.xlu0 %284
    %288 = vset.pattern.permute.xlu0 0
    %289 = vperm.xlu0 %288, %v263
    %v290 = vpop.permute.xlu0 %289
    %293 = vset.pattern.permute.xlu0 0
    %294 = vperm.xlu0 %293, %v264
    %v295 = vpop.permute.xlu0 %294
    %298 = vset.pattern.permute.xlu0 0
    %299 = vperm.xlu0 %298, %v265
    %v300 = vpop.permute.xlu0 %299
    %303 = vset.pattern.permute.xlu0 0
    %304 = vperm.xlu0 %303, %v266
    %v305 = vpop.permute.xlu0 %304
    %308 = vset.pattern.permute.xlu0 0
    %309 = vperm.xlu0 %308, %v267
    %v310 = vpop.permute.xlu0 %309
    %313 = vset.pattern.permute.xlu0 0
    %314 = vperm.xlu0 %313, %v268
    %v315 = vpop.permute.xlu0 %314
    %318 = vset.pattern.permute.xlu0 0
    %319 = vperm.xlu0 %318, %v269
    %v320 = vpop.permute.xlu0 %319
    %323 = vset.pattern.permute.xlu0 0
    %324 = vperm.xlu0 %323, %v270
    %v325 = vpop.permute.xlu0 %324
    %328 = vset.pattern.permute.xlu0 0
    %329 = vperm.xlu0 %328, %v271
    %v330 = vpop.permute.xlu0 %329
    %333 = vset.pattern.permute.xlu0 0
    %334 = vperm.xlu0 %333, %v272
    %v335 = vpop.permute.xlu0 %334
    %338 = vset.pattern.permute.xlu0 0
    %339 = vperm.xlu0 %338, %v273
    %v340 = vpop.permute.xlu0 %339
    %343 = vset.pattern.permute.xlu0 0
    %344 = vperm.xlu0 %343, %v274
    %v345 = vpop.permute.xlu0 %344
    %348 = vset.pattern.permute.xlu0 0
    %349 = vperm.xlu0 %348, %v275
    %v350 = vpop.permute.xlu0 %349
    %353 = vset.pattern.permute.xlu0 0
    %354 = vperm.xlu0 %353, %v276
    %v355 = vpop.permute.xlu0 %354
    %v357 = vmul.f32 %v245, %v280
    %v358 = vmul.f32 %v246, %v285
    %v359 = vmul.f32 %v247, %v290
    %v360 = vmul.f32 %v248, %v295
    %v361 = vmul.f32 %v249, %v300
    %v362 = vmul.f32 %v250, %v305
    %v363 = vmul.f32 %v251, %v310
    %v364 = vmul.f32 %v252, %v315
    %v365 = vmul.f32 %v253, %v320
    %v366 = vmul.f32 %v254, %v325
    %v367 = vmul.f32 %v255, %v330
    %v368 = vmul.f32 %v256, %v335
    %v369 = vmul.f32 %v257, %v340
    %v370 = vmul.f32 %v258, %v345
    %v371 = vmul.f32 %v259, %v350
    %v372 = vmul.f32 %v260, %v355
    %v373 = vld [vmem:[%s3] sm:$0x1]
    %v375 = vperm.slane %v373, 0
    %v377 = vadd.f32 %v357, %v375
    %v378 = vadd.f32 %v358, %v375
    %v379 = vadd.f32 %v359, %v375
    %v380 = vadd.f32 %v360, %v375
    %v381 = vadd.f32 %v361, %v375
    %v382 = vadd.f32 %v362, %v375
    %v383 = vadd.f32 %v363, %v375
    %v384 = vadd.f32 %v364, %v375
    %v385 = vadd.f32 %v365, %v375
    %v386 = vadd.f32 %v366, %v375
    %v387 = vadd.f32 %v367, %v375
    %v388 = vadd.f32 %v368, %v375
    %v389 = vadd.f32 %v369, %v375
    %v390 = vadd.f32 %v370, %v375
    %v391 = vadd.f32 %v371, %v375
    %v392 = vadd.f32 %v372, %v375
    %393 = vst [vmem:[%s4] sm:$0xff] %v377
    %394 = vst [vmem:[%s4 + $0x8] sm:$0xff] %v378
    %395 = vst [vmem:[%s4 + $0x10] sm:$0xff] %v379
    %396 = vst [vmem:[%s4 + $0x18] sm:$0xff] %v380
    %397 = vst [vmem:[%s4 + $0x20] sm:$0xff] %v381
    %398 = vst [vmem:[%s4 + $0x28] sm:$0xff] %v382
    %399 = vst [vmem:[%s4 + $0x30] sm:$0xff] %v383
    %400 = vst [vmem:[%s4 + $0x38] sm:$0xff] %v384
    %401 = vst [vmem:[%s4 + $0x40] sm:$0xff] %v385
    %402 = vst [vmem:[%s4 + $0x48] sm:$0xff] %v386
    %403 = vst [vmem:[%s4 + $0x50] sm:$0xff] %v387
    %404 = vst [vmem:[%s4 + $0x58] sm:$0xff] %v388
    %405 = vst [vmem:[%s4 + $0x60] sm:$0xff] %v389
    %406 = vst [vmem:[%s4 + $0x68] sm:$0xff] %v390
    %407 = vst [vmem:[%s4 + $0x70] sm:$0xff] %v391
    %408 = vst [vmem:[%s4 + $0x78] sm:$0xff] %v392
  $region25: #{gcn_encoder.7} parent=0 // pred_fallthru
    _
  // Predicated region
  $region26: #{gcn_encoder.7} parent=0 // pred_check
    _
  $region27: #{gcn_encoder.7} parent=0 // pred_check_branch
    %410 = sbr.rel (0) target = $region29
  $region28: #{gcn_encoder.7} parent=0 // pred_region
    _
  $region29: #{gcn_encoder.7} parent=0 // pred_fallthru
    _
  // Predicated region
  $region30: #{gcn_encoder.7} parent=0 // pred_check
    _
  $region31: #{gcn_encoder.7} parent=0 // pred_check_branch
    %412 = sbr.rel (0) target = $region33
  $region32: #{gcn_encoder.7} parent=0 // pred_region
    _
  $region33: #{gcn_encoder.7} parent=0 // pred_fallthru
    _

</llo_original>
